<compile_context>
chip_gen: v6e
topology: v6e:2x2x1
jax: 0.10.0
libtpu: 0.0.40
codegen_flags: <defaults>
</compile_context>

<pallas_src>
import functools

import jax
import jax.numpy as jnp
from jax.experimental import pallas as pl
from jax.experimental.pallas import tpu as pltpu

EPS = 1e-5
LANE = 128   # TPU lane width; embedding-table rows pad to a multiple of this
A_W = 8      # lane width of the tiny numeric block (a_num weight rows + 1 bias row)

# Synthetic machine attribute spec (stands in for machine2attinfos[machine]).
ATTINFOS = [
    {"type": "float", "mean": 2.0, "std": 1.5},
    {"type": "str", "enum": ["a", "b", "c", "d", "e"]},   # enum_size = 6
    {"type": "int", "mean": 10.0, "std": 4.0},
    {"type": "str", "enum": ["x", "y", "z"]},             # enum_size = 4
]
HIDDEN = 128  # embed_dim == out_dim in the PyTorch module


def _round_up(x, m):
    return (x + m - 1) // m * m


# ----------------------------------------------------------------------------
# Kernel
# ----------------------------------------------------------------------------
def embed_att_kernel(x_ref, scale_ref, shift_ref, idx_ref, wnum_ref, table_ref,
                     o_ref, *, n_str, a_num):
    """Produces one (TB, H) output tile.

    x_ref    : (TB, A_W)    f32   numeric columns, zero-padded to A_W lanes
    scale_ref: (1, A_W)     f32   1/(std+eps)      (0 on pad lanes)
    shift_ref: (1, A_W)     f32   -mean/(std+eps)  (0 on pad lanes)
    idx_ref  : (TB, n_str)  i32   offset row indices into the stacked table
    wnum_ref : (A_W, H)     f32   rows [0,a_num) = Linear(1,H) weights,
                                  row a_num = summed biases, rest zero
    table_ref: (R_PAD, H)   bf16  concatenated embedding tables (zero pad rows)
    o_ref    : (TB, H)      bf16
    """
    tb = x_ref.shape[0]
    h = wnum_ref.shape[1]
    r_pad = table_ref.shape[0]

    # --- numeric attrs (all f32, VPU): normalize -> sigmoid -> broadcast-FMA ---
    z = x_ref[...] * scale_ref[...] + shift_ref[...]        # (TB, A_W)
    s = jax.nn.sigmoid(z)                                   # lanes >= a_num unused

    # Accumulator initialized with the (folded) summed Linear biases.
    acc = jnp.broadcast_to(wnum_ref[a_num:a_num + 1, :], (tb, h))
    for i in range(a_num):                                  # small, static
        acc = acc + s[:, i:i + 1] * wnum_ref[i:i + 1, :]

    # --- string attrs: multihot over padded table rows, one K=R_PAD bf16 dot ---
    idx = idx_ref[...]                                      # (TB, n_str)
    iota = jax.lax.broadcasted_iota(jnp.int32, (tb, r_pad), 1)
    mh = (iota == idx[:, 0:1]).astype(jnp.int32)
    for j in range(1, n_str):                               # small, static
        mh = mh + (iota == idx[:, j:j + 1]).astype(jnp.int32)
    acc = acc + jnp.dot(mh.astype(jnp.bfloat16), table_ref[...],
                        preferred_element_type=jnp.float32)

    o_ref[...] = acc.astype(o_ref.dtype)


# ----------------------------------------------------------------------------
# Wrapper
# ----------------------------------------------------------------------------
def embed_att_pallas(x_num, scale, shift, idx, w_num, table, a_num, *, tb=512):
    B = x_num.shape[0]
    a_w = x_num.shape[1]
    n_str = idx.shape[1]
    H = w_num.shape[1]
    r_pad = table.shape[0]

    # Batch tile: multiple of 8 sublanes; cap so the grid keeps >= 2 steps when
    # possible (v7x megacore), and pad B to a whole number of tiles.
    tb = _round_up(max(tb, 8), 8)
    b8 = _round_up(B, 8)
    half = _round_up(max(-(-b8 // 2), 8), 8)
    tb_eff = max(8, min(tb, half))
    b_pad = _round_up(b8, tb_eff)

    def pad_rows(a):
        return jnp.pad(a, ((0, b_pad - B), (0, 0))) if b_pad != B else a

    x_num_p = pad_rows(x_num)
    idx_p = pad_rows(idx)          # pad rows look up row 0; sliced off below

    kernel = functools.partial(embed_att_kernel, n_str=n_str, a_num=a_num)

    cost = pl.CostEstimate(
        flops=2 * b_pad * H * (a_num + r_pad),
        transcendentals=b_pad * a_w,                         # sigmoid
        bytes_accessed=(x_num_p.size * 4 + idx_p.size * 4
                        + scale.size * 4 + shift.size * 4
                        + w_num.size * 4 + table.size * 2
                        + b_pad * H * 2),
    )

    out = pl.pallas_call(
        kernel,
        out_shape=jax.ShapeDtypeStruct((b_pad, H), jnp.bfloat16),
        grid=(b_pad // tb_eff,),
        in_specs=[
            pl.BlockSpec((tb_eff, a_w), lambda i: (i, 0)),     # x tile
            pl.BlockSpec((1, a_w), lambda i: (0, 0)),          # scale (resident)
            pl.BlockSpec((1, a_w), lambda i: (0, 0)),          # shift (resident)
            pl.BlockSpec((tb_eff, n_str), lambda i: (i, 0)),   # idx tile
            pl.BlockSpec((a_w, H), lambda i: (0, 0)),          # numeric weights+bias (resident)
            pl.BlockSpec((r_pad, H), lambda i: (0, 0)),        # embedding table (resident)
        ],
        out_specs=pl.BlockSpec((tb_eff, H), lambda i: (i, 0)),
        compiler_params=pltpu.CompilerParams(
            dimension_semantics=("parallel",),   # megacore sharding on v7x
            vmem_limit_bytes=32 * 1024 * 1024,
        ),
        cost_estimate=cost,
    )(x_num_p, scale, shift, idx_p, w_num, table)
    return out[:B]


# ----------------------------------------------------------------------------
# Parameter init & input packing (plain JAX glue)
# ----------------------------------------------------------------------------
def init_params(key, attinfos, hidden):
    """Deterministic parameter init mirroring the nn.Module shapes."""
    params = []
    for info in attinfos:
        key, k1, k2 = jax.random.split(key, 3)
        if info["type"] in ("int", "float"):
            w = jax.random.normal(k1, (hidden, 1), jnp.float32) * 0.02  # Linear(1,H).weight
            b = jax.random.normal(k2, (hidden,), jnp.float32) * 0.02    # Linear(1,H).bias
            params.append((w, b))
        else:
            enum_size = len(info["enum"]) + 1
            tbl = jax.random.normal(k1, (enum_size, hidden), jnp.float32) * 0.02
            params.append(tbl)
    return params


def prepare_kernel_inputs(x, params, attinfos):
    """Split numeric/str columns, pack small f32 numeric block + bf16 table."""
    num_cols = [i for i, a in enumerate(attinfos) if a["type"] in ("int", "float")]
    str_cols = [i for i, a in enumerate(attinfos) if a["type"] == "str"]
    a_num, n_str = len(num_cols), len(str_cols)
    assert a_num + 1 <= A_W, "raise A_W for more numeric attributes"
    hidden = params[num_cols[0]][0].shape[0]

    # Numeric columns in a narrow (B, A_W) block (zero pad lanes).
    x_num = jnp.zeros((x.shape[0], A_W), jnp.float32)
    x_num = x_num.at[:, :a_num].set(x[:, jnp.array(num_cols)])

    mean = jnp.array([attinfos[i]["mean"] for i in num_cols], jnp.float32)
    std = jnp.array([attinfos[i]["std"] for i in num_cols], jnp.float32)
    inv = 1.0 / (std + EPS)                                   # precomputed reciprocal
    scale = jnp.zeros((1, A_W), jnp.float32).at[0, :a_num].set(inv)
    shift = jnp.zeros((1, A_W), jnp.float32).at[0, :a_num].set(-mean * inv)

    # Numeric Linear(1,H) weights (rows 0..a_num-1) + folded summed bias (row a_num).
    w_num = jnp.zeros((A_W, hidden), jnp.float32)
    w_num = w_num.at[:a_num, :].set(
        jnp.stack([params[i][0][:, 0] for i in num_cols], axis=0))
    w_num = w_num.at[a_num, :].set(
        jnp.sum(jnp.stack([params[i][1] for i in num_cols], 0), 0))

    # Concatenated embedding tables, zero-padded to a multiple of LANE rows, bf16.
    tables = [params[i] for i in str_cols]
    offsets, off = [], 0
    for t in tables:
        offsets.append(off)
        off += t.shape[0]
    r_pad = _round_up(off, LANE)
    table = jnp.zeros((r_pad, hidden), jnp.float32)
    table = table.at[:off, :].set(jnp.concatenate(tables, axis=0)).astype(jnp.bfloat16)

    # Offset indices -> each str column hits a disjoint row range of the table.
    # NOTE: out-of-range codes silently contribute a wrong/zero row; nn.Embedding
    # would raise. Inputs are assumed valid.
    idx = (x[:, jnp.array(str_cols)].astype(jnp.int32)
           + jnp.array(offsets, jnp.int32)[None, :])
    return x_num, scale, shift, idx, w_num, table, a_num


def embed_att_reference(x, params, attinfos):
    """Pure-JAX f32 reference of the PyTorch forward (attbind='add')."""
    outs = []
    for i, info in enumerate(attinfos):
        xi = x[:, i]
        if info["type"] in ("int", "float"):
            z = (xi - info["mean"]) / (info["std"] + EPS)
            s = jax.nn.sigmoid(z)[:, None]                   # (B, 1)
            w, b = params[i]                                 # (H,1), (H,)
            outs.append(s @ w.T + b)
        else:
            tbl = params[i]
            outs.append(tbl[xi.astype(jnp.int32)])
    return jnp.sum(jnp.stack(outs, axis=0), axis=0)


if __name__ == "__main__":
    B = 200  # tb_eff caps at 104 -> 2 grid steps (both v7x TCs busy)

    key = jax.random.PRNGKey(0)
    kp, kx = jax.random.split(key)
    params = init_params(kp, ATTINFOS, HIDDEN)

    # Build x: numeric columns are real-valued, str columns hold integer codes.
    cols = []
    for i, info in enumerate(ATTINFOS):
        ki = jax.random.fold_in(kx, i)
        if info["type"] in ("int", "float"):
            c = info["mean"] + info["std"] * jax.random.normal(ki, (B,), jnp.float32)
        else:
            c = jax.random.randint(ki, (B,), 0, len(info["enum"]) + 1).astype(jnp.float32)
        cols.append(c)
    x = jnp.stack(cols, axis=1)  # (B, A) float32, PyTorch input convention

    kernel_inputs = prepare_kernel_inputs(x, params, ATTINFOS)
    out = embed_att_pallas(*kernel_inputs)   # default tb (consistent with wrapper)
    out = jax.block_until_ready(out)

    ref = embed_att_reference(x, params, ATTINFOS)
    assert out.shape == (B, HIDDEN)
    out_f32 = out.astype(jnp.float32)
    max_err = jnp.max(jnp.abs(out_f32 - ref))
    # bf16 table + bf16 output -> tolerance loosened vs the pure-f32 reference.
    assert jnp.allclose(out_f32, ref, rtol=2e-2, atol=2e-3), f"max abs err {max_err}"
    print("KERNEL_OK")
</pallas_src>

<mosaic_0001>
module attributes {stable_mosaic.version = 11 : i64} {
  func.func @embed_att_kernel(%arg0: i32, %arg1: memref<104x8xf32, #tpu.memory_space<vmem>>, %arg2: memref<1x8xf32, #tpu.memory_space<vmem>>, %arg3: memref<1x8xf32, #tpu.memory_space<vmem>>, %arg4: memref<104x2xi32, #tpu.memory_space<vmem>>, %arg5: memref<8x128xf32, #tpu.memory_space<vmem>>, %arg6: memref<128x128xbf16, #tpu.memory_space<vmem>>, %arg7: memref<104x128xbf16, #tpu.memory_space<vmem>>) attributes {dimension_semantics = [#tpu.dimension_semantics<parallel>], iteration_bounds = array<i64: 2>, scalar_prefetch = 0 : i64, scratch_operands = 0 : i64, tpu.core_type = #tpu.core_type<tc>, window_params = [{transform_indices = @transform_0, window_bounds = array<i64: 104, 8>}, {pipeline_mode = #tpu.pipeline_mode<synchronous>, transform_indices = @transform_1, window_bounds = array<i64: 1, 8>}, {pipeline_mode = #tpu.pipeline_mode<synchronous>, transform_indices = @transform_2, window_bounds = array<i64: 1, 8>}, {transform_indices = @transform_3, window_bounds = array<i64: 104, 2>}, {pipeline_mode = #tpu.pipeline_mode<synchronous>, transform_indices = @transform_4, window_bounds = array<i64: 8, 128>}, {pipeline_mode = #tpu.pipeline_mode<synchronous>, transform_indices = @transform_5, window_bounds = array<i64: 128, 128>}, {transform_indices = @transform_6, window_bounds = array<i64: 104, 128>}]} {
    %c0 = arith.constant 0 : index
    %c0_0 = arith.constant 0 : index
    %0 = vector.load %arg1[%c0, %c0_0] : memref<104x8xf32, #tpu.memory_space<vmem>>, vector<104x8xf32>
    %c0_1 = arith.constant 0 : index
    %c0_2 = arith.constant 0 : index
    %1 = vector.load %arg2[%c0_1, %c0_2] : memref<1x8xf32, #tpu.memory_space<vmem>>, vector<1x8xf32>
    %2 = vector.broadcast %1 : vector<1x8xf32> to vector<104x8xf32>
    %3 = arith.mulf %0, %2 : vector<104x8xf32>
    %c0_3 = arith.constant 0 : index
    %c0_4 = arith.constant 0 : index
    %4 = vector.load %arg3[%c0_3, %c0_4] : memref<1x8xf32, #tpu.memory_space<vmem>>, vector<1x8xf32>
    %5 = vector.broadcast %4 : vector<1x8xf32> to vector<104x8xf32>
    %6 = arith.addf %3, %5 : vector<104x8xf32>
    %7 = arith.negf %6 : vector<104x8xf32>
    %8 = math.exp %7 : vector<104x8xf32>
    %cst = arith.constant 1.000000e+00 : f32
    %9 = vector.broadcast %cst : f32 to vector<104x8xf32>
    %10 = arith.addf %9, %8 : vector<104x8xf32>
    %11 = arith.divf %9, %10 : vector<104x8xf32>
    %c2 = arith.constant 2 : index
    %c0_5 = arith.constant 0 : index
    %12 = vector.load %arg5[%c2, %c0_5] : memref<8x128xf32, #tpu.memory_space<vmem>>, vector<1x128xf32>
    %13 = vector.shape_cast %12 : vector<1x128xf32> to vector<1x128xf32>
    %14 = vector.broadcast %13 : vector<1x128xf32> to vector<104x128xf32>
    %15 = vector.extract_strided_slice %11 {offsets = [0, 0], sizes = [104, 1], strides = [1, 1]} : vector<104x8xf32> to vector<104x1xf32>
    %c0_6 = arith.constant 0 : index
    %c0_7 = arith.constant 0 : index
    %16 = vector.load %arg5[%c0_6, %c0_7] : memref<8x128xf32, #tpu.memory_space<vmem>>, vector<1x128xf32>
    %17 = vector.broadcast %15 : vector<104x1xf32> to vector<104x128xf32>
    %18 = vector.broadcast %16 : vector<1x128xf32> to vector<104x128xf32>
    %19 = arith.mulf %17, %18 : vector<104x128xf32>
    %20 = arith.addf %14, %19 : vector<104x128xf32>
    %21 = vector.extract_strided_slice %11 {offsets = [0, 1], sizes = [104, 1], strides = [1, 1]} : vector<104x8xf32> to vector<104x1xf32>
    %c1 = arith.constant 1 : index
    %c0_8 = arith.constant 0 : index
    %22 = vector.load %arg5[%c1, %c0_8] : memref<8x128xf32, #tpu.memory_space<vmem>>, vector<1x128xf32>
    %23 = vector.broadcast %21 : vector<104x1xf32> to vector<104x128xf32>
    %24 = vector.broadcast %22 : vector<1x128xf32> to vector<104x128xf32>
    %25 = arith.mulf %23, %24 : vector<104x128xf32>
    %26 = arith.addf %20, %25 : vector<104x128xf32>
    %c0_9 = arith.constant 0 : index
    %c0_10 = arith.constant 0 : index
    %27 = vector.load %arg4[%c0_9, %c0_10] : memref<104x2xi32, #tpu.memory_space<vmem>>, vector<104x2xi32>
    %28 = tpu.iota {dimensions = array<i32: 1>} : vector<104x128xi32>
    %29 = vector.extract_strided_slice %27 {offsets = [0, 0], sizes = [104, 1], strides = [1, 1]} : vector<104x2xi32> to vector<104x1xi32>
    %30 = vector.broadcast %29 : vector<104x1xi32> to vector<104x128xi32>
    %31 = arith.cmpi eq, %28, %30 : vector<104x128xi32>
    %32 = arith.extui %31 : vector<104x128xi1> to vector<104x128xi32>
    %33 = vector.extract_strided_slice %27 {offsets = [0, 1], sizes = [104, 1], strides = [1, 1]} : vector<104x2xi32> to vector<104x1xi32>
    %34 = vector.broadcast %33 : vector<104x1xi32> to vector<104x128xi32>
    %35 = arith.cmpi eq, %28, %34 : vector<104x128xi32>
    %36 = arith.extui %35 : vector<104x128xi1> to vector<104x128xi32>
    %37 = arith.addi %32, %36 : vector<104x128xi32>
    %38 = arith.sitofp %37 : vector<104x128xi32> to vector<104x128xbf16>
    %c0_11 = arith.constant 0 : index
    %c0_12 = arith.constant 0 : index
    %39 = vector.load %arg6[%c0_11, %c0_12] : memref<128x128xbf16, #tpu.memory_space<vmem>>, vector<128x128xbf16>
    %cst_13 = arith.constant dense<0.000000e+00> : vector<104x128xf32>
    %40 = tpu.matmul %38, %39, %cst_13 {dimension_numbers = #tpu.dot_dimension_numbers<[1], [0], [0], [1], [0, 0, 1, 1], [], []>} : vector<104x128xbf16>, vector<128x128xbf16>, vector<104x128xf32> -> vector<104x128xf32>
    %41 = arith.addf %26, %40 : vector<104x128xf32>
    %42 = arith.truncf %41 : vector<104x128xf32> to vector<104x128xbf16>
    %c0_14 = arith.constant 0 : index
    %c0_15 = arith.constant 0 : index
    %43 = vector.load %arg7[%c0_14, %c0_15] : memref<104x128xbf16, #tpu.memory_space<vmem>>, vector<104x128xbf16>
    tpu.vector_store %arg7[%c0_14, %c0_15], %42 {strides = array<i32>} : memref<104x128xbf16, #tpu.memory_space<vmem>>, vector<104x128xbf16>,
    return
  }
  func.func @transform_0(%arg0: i32) -> (i32, i32) {
    %c0_i32 = arith.constant 0 : i32
    %c0_i32_0 = arith.constant 0 : i32
    return %arg0, %c0_i32 : i32, i32
  }
  func.func @transform_1(%arg0: i32) -> (i32, i32) {
    %c0_i32 = arith.constant 0 : i32
    %c0_i32_0 = arith.constant 0 : i32
    %c0_i32_1 = arith.constant 0 : i32
    return %c0_i32, %c0_i32_0 : i32, i32
  }
  func.func @transform_2(%arg0: i32) -> (i32, i32) {
    %c0_i32 = arith.constant 0 : i32
    %c0_i32_0 = arith.constant 0 : i32
    %c0_i32_1 = arith.constant 0 : i32
    return %c0_i32, %c0_i32_0 : i32, i32
  }
  func.func @transform_3(%arg0: i32) -> (i32, i32) {
    %c0_i32 = arith.constant 0 : i32
    %c0_i32_0 = arith.constant 0 : i32
    return %arg0, %c0_i32 : i32, i32
  }
  func.func @transform_4(%arg0: i32) -> (i32, i32) {
    %c0_i32 = arith.constant 0 : i32
    %c0_i32_0 = arith.constant 0 : i32
    %c0_i32_1 = arith.constant 0 : i32
    return %c0_i32, %c0_i32_0 : i32, i32
  }
  func.func @transform_5(%arg0: i32) -> (i32, i32) {
    %c0_i32 = arith.constant 0 : i32
    %c0_i32_0 = arith.constant 0 : i32
    %c0_i32_1 = arith.constant 0 : i32
    return %c0_i32, %c0_i32_0 : i32, i32
  }
  func.func @transform_6(%arg0: i32) -> (i32, i32) {
    %c0_i32 = arith.constant 0 : i32
    %c0_i32_0 = arith.constant 0 : i32
    return %arg0, %c0_i32 : i32, i32
  }
}

</mosaic_0001>

<llo_original>
// kernel: tpu_custom_call.1
$region0: #{tpu_custom_call.1}
  #allocation0 [shape = 'u32[]', space=smem, size = 0x4, offset = 0x4, fixed_abs, tag = 'smem constant byte address 0x4 - core index']
  #allocation1 [shape = 'u32[144,128]{1,0:T(1,128)}', space=vmem, size = 0x12000, scoped, tag = 'internal scratch']
  %s0 = inlined_call_operand.vmem [shape: f32[208,8], index: 0, kind: input, shape index: {}]
  %s1 = inlined_call_operand.vmem [shape: f32[1,8], index: 1, kind: input, shape index: {}]
  %s2 = inlined_call_operand.vmem [shape: f32[1,8], index: 2, kind: input, shape index: {}]
  %s3 = inlined_call_operand.vmem [shape: s32[208,2], index: 3, kind: input, shape index: {}]
  %s4 = inlined_call_operand.vmem [shape: f32[8,128], index: 4, kind: input, shape index: {}]
  %s5 = inlined_call_operand.vmem [shape: bf16[128,128], index: 5, kind: input, shape index: {}]
  %s6 = inlined_call_operand.hbm [shape: bf16[208,128], index: 6, kind: output, shape index: {}]
  %s7 = sld [smem:[#allocation0]]
  $region57: #{tpu_custom_call.1} parent=0
    _
  %s9 = ssub.s32 1, %s7
  %s10 = scalar_select 0, %s9, %s7
  $region1: #{tpu_custom_call.1} parent=0
    #allocation2 [shape = 'u8[53248]{0}', space=vmem, size = 0xd000, scoped, tag = 'output window, operand 0']
    #allocation3 [shape = 's32[2]{0}', space=sflag, size = 0x8, scoped, tag = 'scoped memory for tpu_custom_call.1']
    %11 = vsyncpa [#allocation3], 0
    %s12 = scalar_lea.sflag [#allocation3], 1
    %13 = vsyncpa %s12, 0
    loop: start=0, step=1, limit=4
    $region2: #{tpu_custom_call.1} parent=1 // loop_pre_header
      _
    $region3: #{tpu_custom_call.1} parent=1 // loop_header
      %s15 = sphi 0, %s19
      %p16 = scmp.ge.s32.totalorder %s15, 4
      %s25 = sphi 0, %s27
      %s28 = sphi 0, %s25
      %s29 = sphi 0, %s28
      %s45 = sphi 0, %s29
      %s49 = sphi 0, %s49
      %s51 = sphi 0, %s49
      %s52 = sphi 0, %s51
      %s66 = sphi 0, %s52
      %s70 = sphi 0, %s70
      %s72 = sphi 0, %s70
      %s73 = sphi 0, %s72
      %s87 = sphi 0, %s73
      %s93 = sphi 0, %s95
      %s96 = sphi 0, %s93
      %s97 = sphi 0, %s96
      %s113 = sphi 0, %s97
      %s117 = sphi 0, %s117
      %s119 = sphi 0, %s117
      %s120 = sphi 0, %s119
      %s134 = sphi 0, %s120
      %s138 = sphi 0, %s138
      %s140 = sphi 0, %s138
      %s141 = sphi 0, %s140
      %s155 = sphi 0, %s141
      %s161 = sphi 0, %s163
      %s164 = sphi 0, %s161
      %s165 = sphi 0, %s164
      %s181 = sphi 0, %s165
    $region4: #{tpu_custom_call.1} parent=1 // loop_header_branch
      %18 = sbr.rel (%p16) target = $region8
    $region5: #{tpu_custom_call.1} parent=1 // loop_body
      %s20 = ssub.s32 %s15, 1
      %s21 = ssub.s32 %s15, 2
      %s22 = sadd.s32 %s15, 1
      %s23 = ssub.s32 %s15, %s22
      %p24 = scmp.eq.s32.totalorder %s23, 0
      %s26 = sadd.s32 %s25, 1
      %s27 = scalar_select %p24, %s25, %s26
      %p30 = pneg %p24
      %p31 = scmp.eq.s32.totalorder %s15, 1
      %p32 = por %p30, %p31
      %p33 = scmp.ne.s32.totalorder %s25, %s28
      %p34 = scmp.eq.s32.totalorder %s15, 0
      %p35 = por %p33, %p34
      %p36 = scmp.ne.s32.totalorder %s25, %s28
      %p37 = scmp.eq.s32.totalorder %s20, 1
      %p38 = por %p36, %p37
      %p39 = scmp.ne.s32.totalorder %s28, %s29
      %p40 = scmp.eq.s32.totalorder %s20, 0
      %p41 = por %p39, %p40
      %p42 = scmp.ne.s32.totalorder %s28, %s29
      %p43 = scmp.eq.s32.totalorder %s21, 1
      %p44 = por %p42, %p43
      %p46 = scmp.ne.s32.totalorder %s29, %s45
      %p47 = scmp.eq.s32.totalorder %s21, 0
      %p48 = por %p46, %p47
      %s50 = sadd.s32 %s49, 1
      %p53 = scmp.eq.s32.totalorder %s15, 1
      %p54 = scmp.ne.s32.totalorder %s49, %s51
      %p55 = scmp.eq.s32.totalorder %s15, 0
      %p56 = por %p54, %p55
      %p57 = scmp.ne.s32.totalorder %s49, %s51
      %p58 = scmp.eq.s32.totalorder %s20, 1
      %p59 = por %p57, %p58
      %p60 = scmp.ne.s32.totalorder %s51, %s52
      %p61 = scmp.eq.s32.totalorder %s20, 0
      %p62 = por %p60, %p61
      %p63 = scmp.ne.s32.totalorder %s51, %s52
      %p64 = scmp.eq.s32.totalorder %s21, 1
      %p65 = por %p63, %p64
      %p67 = scmp.ne.s32.totalorder %s52, %s66
      %p68 = scmp.eq.s32.totalorder %s21, 0
      %p69 = por %p67, %p68
      %s71 = sadd.s32 %s70, 1
      %p74 = scmp.eq.s32.totalorder %s15, 1
      %p75 = scmp.ne.s32.totalorder %s70, %s72
      %p76 = scmp.eq.s32.totalorder %s15, 0
      %p77 = por %p75, %p76
      %p78 = scmp.ne.s32.totalorder %s70, %s72
      %p79 = scmp.eq.s32.totalorder %s20, 1
      %p80 = por %p78, %p79
      %p81 = scmp.ne.s32.totalorder %s72, %s73
      %p82 = scmp.eq.s32.totalorder %s20, 0
      %p83 = por %p81, %p82
      %p84 = scmp.ne.s32.totalorder %s72, %s73
      %p85 = scmp.eq.s32.totalorder %s21, 1
      %p86 = por %p84, %p85
      %p88 = scmp.ne.s32.totalorder %s73, %s87
      %p89 = scmp.eq.s32.totalorder %s21, 0
      %p90 = por %p88, %p89
      %s91 = ssub.s32 %s15, %s22
      %p92 = scmp.eq.s32.totalorder %s91, 0
      %s94 = sadd.s32 %s93, 1
      %s95 = scalar_select %p92, %s93, %s94
      %p98 = pneg %p92
      %p99 = scmp.eq.s32.totalorder %s15, 1
      %p100 = por %p98, %p99
      %p101 = scmp.ne.s32.totalorder %s93, %s96
      %p102 = scmp.eq.s32.totalorder %s15, 0
      %p103 = por %p101, %p102
      %p104 = scmp.ne.s32.totalorder %s93, %s96
      %p105 = scmp.eq.s32.totalorder %s20, 1
      %p106 = por %p104, %p105
      %p107 = scmp.ne.s32.totalorder %s96, %s97
      %p108 = scmp.eq.s32.totalorder %s20, 0
      %p109 = por %p107, %p108
      %p110 = scmp.ne.s32.totalorder %s96, %s97
      %p111 = scmp.eq.s32.totalorder %s21, 1
      %p112 = por %p110, %p111
      %p114 = scmp.ne.s32.totalorder %s97, %s113
      %p115 = scmp.eq.s32.totalorder %s21, 0
      %p116 = por %p114, %p115
      %s118 = sadd.s32 %s117, 1
      %p121 = scmp.eq.s32.totalorder %s15, 1
      %p122 = scmp.ne.s32.totalorder %s117, %s119
      %p123 = scmp.eq.s32.totalorder %s15, 0
      %p124 = por %p122, %p123
      %p125 = scmp.ne.s32.totalorder %s117, %s119
      %p126 = scmp.eq.s32.totalorder %s20, 1
      %p127 = por %p125, %p126
      %p128 = scmp.ne.s32.totalorder %s119, %s120
      %p129 = scmp.eq.s32.totalorder %s20, 0
      %p130 = por %p128, %p129
      %p131 = scmp.ne.s32.totalorder %s119, %s120
      %p132 = scmp.eq.s32.totalorder %s21, 1
      %p133 = por %p131, %p132
      %p135 = scmp.ne.s32.totalorder %s120, %s134
      %p136 = scmp.eq.s32.totalorder %s21, 0
      %p137 = por %p135, %p136
      %s139 = sadd.s32 %s138, 1
      %p142 = scmp.eq.s32.totalorder %s15, 1
      %p143 = scmp.ne.s32.totalorder %s138, %s140
      %p144 = scmp.eq.s32.totalorder %s15, 0
      %p145 = por %p143, %p144
      %p146 = scmp.ne.s32.totalorder %s138, %s140
      %p147 = scmp.eq.s32.totalorder %s20, 1
      %p148 = por %p146, %p147
      %p149 = scmp.ne.s32.totalorder %s140, %s141
      %p150 = scmp.eq.s32.totalorder %s20, 0
      %p151 = por %p149, %p150
      %p152 = scmp.ne.s32.totalorder %s140, %s141
      %p153 = scmp.eq.s32.totalorder %s21, 1
      %p154 = por %p152, %p153
      %p156 = scmp.ne.s32.totalorder %s141, %s155
      %p157 = scmp.eq.s32.totalorder %s21, 0
      %p158 = por %p156, %p157
      %s159 = ssub.s32 %s15, %s22
      %p160 = scmp.eq.s32.totalorder %s159, 0
      %s162 = sadd.s32 %s161, 1
      %s163 = scalar_select %p160, %s161, %s162
      %p166 = pneg %p160
      %p167 = scmp.eq.s32.totalorder %s15, 1
      %p168 = por %p166, %p167
      %p169 = scmp.ne.s32.totalorder %s161, %s164
      %p170 = scmp.eq.s32.totalorder %s15, 0
      %p171 = por %p169, %p170
      %p172 = scmp.ne.s32.totalorder %s161, %s164
      %p173 = scmp.eq.s32.totalorder %s20, 1
      %p174 = por %p172, %p173
      %p175 = scmp.ne.s32.totalorder %s164, %s165
      %p176 = scmp.eq.s32.totalorder %s20, 0
      %p177 = por %p175, %p176
      %p178 = scmp.ne.s32.totalorder %s164, %s165
      %p179 = scmp.eq.s32.totalorder %s21, 1
      %p180 = por %p178, %p179
      %p182 = scmp.ne.s32.totalorder %s165, %s181
      %p183 = scmp.eq.s32.totalorder %s21, 0
      %p184 = por %p182, %p183
      %p185 = scmp.le.s32.totalorder 1, %s15
      %p186 = scmp.lt.s32.totalorder %s15, 3
      %p187 = pnand %p185, %p186
      %p188 = pneg %p187
      // Predicated region
      $region9: #{tpu_custom_call.1} parent=5 // pred_check
        _
      $region10: #{tpu_custom_call.1} parent=5 // pred_check_branch
        %190 = sbr.rel (%p187) target = $region12
      $region11: #{tpu_custom_call.1} parent=5 // pred_region
        %s191 = ssub.s32 %s15, 1
        // Predicated region
        $region13: #{tpu_custom_call.1} parent=11 // pred_check
          %p192 = pneg %p62
        $region14: #{tpu_custom_call.1} parent=11 // pred_check_branch
          %194 = sbr.rel (%p192) target = $region16
        $region15: #{tpu_custom_call.1} parent=11 // pred_region
          _
        $region16: #{tpu_custom_call.1} parent=11 // pred_fallthru
          _
        // Predicated region
        $region17: #{tpu_custom_call.1} parent=11 // pred_check
          %p195 = pneg %p83
        $region18: #{tpu_custom_call.1} parent=11 // pred_check_branch
          %197 = sbr.rel (%p195) target = $region20
        $region19: #{tpu_custom_call.1} parent=11 // pred_region
          _
        $region20: #{tpu_custom_call.1} parent=11 // pred_fallthru
          _
        // Predicated region
        $region21: #{tpu_custom_call.1} parent=11 // pred_check
          %p198 = pneg %p130
        $region22: #{tpu_custom_call.1} parent=11 // pred_check_branch
          %200 = sbr.rel (%p198) target = $region24
        $region23: #{tpu_custom_call.1} parent=11 // pred_region
          _
        $region24: #{tpu_custom_call.1} parent=11 // pred_fallthru
          _
        // Predicated region
        $region25: #{tpu_custom_call.1} parent=11 // pred_check
          %p201 = pneg %p151
        $region26: #{tpu_custom_call.1} parent=11 // pred_check_branch
          %203 = sbr.rel (%p201) target = $region28
        $region27: #{tpu_custom_call.1} parent=11 // pred_region
          _
        $region28: #{tpu_custom_call.1} parent=11 // pred_fallthru
          _
      $region12: #{tpu_custom_call.1} parent=5 // pred_fallthru
        _
      %p204 = scmp.lt.s32.totalorder %s15, 2
      // Predicated region
      $region29: #{tpu_custom_call.1} parent=5 // pred_check
        %p205 = pneg %p204
      $region30: #{tpu_custom_call.1} parent=5 // pred_check_branch
        %207 = sbr.rel (%p205) target = $region32
      $region31: #{tpu_custom_call.1} parent=5 // pred_region
        // Predicated region
        $region33: #{tpu_custom_call.1} parent=31 // pred_check
          %p208 = pneg %p35
        $region34: #{tpu_custom_call.1} parent=31 // pred_check_branch
          %210 = sbr.rel (%p208) target = $region36
        $region35: #{tpu_custom_call.1} parent=31 // pred_region
          %s211 = smul.u32 13, %s15
          %p212 = scmp.lt.s32.totalorder %s211, 25
          %s213 = scalar_select %p212, %s211, 25
          %s214 = smul.addr %s213, 8
          %s215 = scalar_lea.vmem %s0, %s214
          %s216 = smul.u32 13, %s15
        $region36: #{tpu_custom_call.1} parent=31 // pred_fallthru
          _
        // Predicated region
        $region37: #{tpu_custom_call.1} parent=31 // pred_check
          %p217 = pneg %p103
        $region38: #{tpu_custom_call.1} parent=31 // pred_check_branch
          %219 = sbr.rel (%p217) target = $region40
        $region39: #{tpu_custom_call.1} parent=31 // pred_region
          %s220 = smul.u32 13, %s15
          %p221 = scmp.lt.s32.totalorder %s220, 25
          %s222 = scalar_select %p221, %s220, 25
          %s223 = smul.addr %s222, 8
          %s224 = scalar_lea.vmem %s3, %s223
          %s225 = smul.u32 13, %s15
        $region40: #{tpu_custom_call.1} parent=31 // pred_fallthru
          _
      $region32: #{tpu_custom_call.1} parent=5 // pred_fallthru
        _
      %p226 = scmp.le.s32.totalorder 1, %s15
      %p227 = scmp.lt.s32.totalorder %s15, 3
      %p228 = pnand %p226, %p227
      %p229 = pneg %p228
      // Predicated region
      $region41: #{tpu_custom_call.1} parent=5 // pred_check
        _
      $region42: #{tpu_custom_call.1} parent=5 // pred_check_branch
        %231 = sbr.rel (%p228) target = $region44
      $region43: #{tpu_custom_call.1} parent=5 // pred_region
        %s232 = ssub.s32 %s15, 1
        %s233 = smul.u32 13, %s20
        %p234 = scmp.lt.s32.totalorder %s233, 25
        %s235 = scalar_select %p234, %s233, 25
        %s236 = smul.addr %s235, 8
        %s237 = scalar_lea.vmem %s0, %s236
        %p238 = pneg %p41
        %p239 = pneg %p38
        %p240 = pneg %p62
        %p241 = pneg %p59
        %p242 = pneg %p83
        %p243 = pneg %p80
        %s244 = smul.u32 13, %s20
        %p245 = scmp.lt.s32.totalorder %s244, 25
        %s246 = scalar_select %p245, %s244, 25
        %s247 = smul.addr %s246, 8
        %s248 = scalar_lea.vmem %s3, %s247
        %p249 = pneg %p109
        %p250 = pneg %p106
        %p251 = pneg %p130
        %p252 = pneg %p127
        %p253 = pneg %p151
        %p254 = pneg %p148
        %p255 = pneg %p177
        %p256 = pneg %p174
        %s257 = sand.u32 %s164, 1
        %s258 = scalar_lea.sflag [#allocation3], %s257
        %s259 = sand.u32 %s164, 1
        %s260 = smul.addr %s259, 52
        %s261 = scalar_lea.vmem [#allocation2], %s260
        %s262 = smul.u32 13, %s20
        %p263 = scmp.lt.s32.totalorder %s262, 25
        %s264 = scalar_select %p263, %s262, 25
        %s265 = smul.addr %s264, 8
        %s266 = scalar_lea.vmem %s0, %s265
        %s267 = smul.u32 13, %s20
        %s268 = smul.u32 13, %s20
        %p269 = scmp.lt.s32.totalorder %s268, 25
        %s270 = scalar_select %p269, %s268, 25
        %s271 = smul.addr %s270, 8
        %s272 = scalar_lea.vmem %s3, %s271
        %s273 = smul.u32 13, %s20
        %s274 = smul.u32 13, %s20
        %v276 = vld [vmem:[%s266] sm:$0xff]
        %v277 = vld [vmem:[%s266 + $0x8] sm:$0xff]
        %v278 = vld [vmem:[%s266 + $0x10] sm:$0xff]
        %v279 = vld [vmem:[%s266 + $0x18] sm:$0xff]
        %v280 = vld [vmem:[%s266 + $0x20] sm:$0xff]
        %v281 = vld [vmem:[%s266 + $0x28] sm:$0xff]
        %v282 = vld [vmem:[%s266 + $0x30] sm:$0xff]
        %v283 = vld [vmem:[%s266 + $0x38] sm:$0xff]
        %v284 = vld [vmem:[%s266 + $0x40] sm:$0xff]
        %v285 = vld [vmem:[%s266 + $0x48] sm:$0xff]
        %v286 = vld [vmem:[%s266 + $0x50] sm:$0xff]
        %v287 = vld [vmem:[%s266 + $0x58] sm:$0xff]
        %v288 = vld [vmem:[%s266 + $0x60] sm:$0xff]
        %v289 = vld [vmem:[%s1] sm:$0x1]
        %v291 = vlaneseq
        %v292 = vshrl.u32 %v291, 7
        %v293 = vsub.s32 0, %v292
        %v294 = vrot.slane %v289, %v293
        %v296 = vmul.f32 %v276, %v294
        %v297 = vmul.f32 %v277, %v294
        %v298 = vmul.f32 %v278, %v294
        %v299 = vmul.f32 %v279, %v294
        %v300 = vmul.f32 %v280, %v294
        %v301 = vmul.f32 %v281, %v294
        %v302 = vmul.f32 %v282, %v294
        %v303 = vmul.f32 %v283, %v294
        %v304 = vmul.f32 %v284, %v294
        %v305 = vmul.f32 %v285, %v294
        %v306 = vmul.f32 %v286, %v294
        %v307 = vmul.f32 %v287, %v294
        %v308 = vmul.f32 %v288, %v294
        %v309 = vld [vmem:[%s2] sm:$0x1]
        %v311 = vlaneseq
        %v312 = vshrl.u32 %v311, 7
        %v313 = vsub.s32 0, %v312
        %v314 = vrot.slane %v309, %v313
        %v316 = vadd.f32 %v296, %v314
        %v317 = vadd.f32 %v297, %v314
        %v318 = vadd.f32 %v298, %v314
        %v319 = vadd.f32 %v299, %v314
        %v320 = vadd.f32 %v300, %v314
        %v321 = vadd.f32 %v301, %v314
        %v322 = vadd.f32 %v302, %v314
        %v323 = vadd.f32 %v303, %v314
        %v324 = vadd.f32 %v304, %v314
        %v325 = vadd.f32 %v305, %v314
        %v326 = vadd.f32 %v306, %v314
        %v327 = vadd.f32 %v307, %v314
        %v328 = vadd.f32 %v308, %v314
        %v329 = vxor.u32 %v316, 2147483648
        %v330 = vxor.u32 %v317, 2147483648
        %v331 = vxor.u32 %v318, 2147483648
        %v332 = vxor.u32 %v319, 2147483648
        %v333 = vxor.u32 %v320, 2147483648
        %v334 = vxor.u32 %v321, 2147483648
        %v335 = vxor.u32 %v322, 2147483648
        %v336 = vxor.u32 %v323, 2147483648
        %v337 = vxor.u32 %v324, 2147483648
        %v338 = vxor.u32 %v325, 2147483648
        %v339 = vxor.u32 %v326, 2147483648
        %v340 = vxor.u32 %v327, 2147483648
        %v341 = vxor.u32 %v328, 2147483648
        %v342 = vmul.f32 %v329, 1.442695
        %v343 = vpow.pop %v342
        %v344 = vmul.f32 %v330, 1.442695
        %v345 = vpow.pop %v344
        %v346 = vmul.f32 %v331, 1.442695
        %v347 = vpow.pop %v346
        %v348 = vmul.f32 %v332, 1.442695
        %v349 = vpow.pop %v348
        %v350 = vmul.f32 %v333, 1.442695
        %v351 = vpow.pop %v350
        %v352 = vmul.f32 %v334, 1.442695
        %v353 = vpow.pop %v352
        %v354 = vmul.f32 %v335, 1.442695
        %v355 = vpow.pop %v354
        %v356 = vmul.f32 %v336, 1.442695
        %v357 = vpow.pop %v356
        %v358 = vmul.f32 %v337, 1.442695
        %v359 = vpow.pop %v358
        %v360 = vmul.f32 %v338, 1.442695
        %v361 = vpow.pop %v360
        %v362 = vmul.f32 %v339, 1.442695
        %v363 = vpow.pop %v362
        %v364 = vmul.f32 %v340, 1.442695
        %v365 = vpow.pop %v364
        %v366 = vmul.f32 %v341, 1.442695
        %v367 = vpow.pop %v366
        %v368 = vadd.f32 %v343, 1.0
        %v369 = vadd.f32 %v345, 1.0
        %v370 = vadd.f32 %v347, 1.0
        %v371 = vadd.f32 %v349, 1.0
        %v372 = vadd.f32 %v351, 1.0
        %v373 = vadd.f32 %v353, 1.0
        %v374 = vadd.f32 %v355, 1.0
        %v375 = vadd.f32 %v357, 1.0
        %v376 = vadd.f32 %v359, 1.0
        %v377 = vadd.f32 %v361, 1.0
        %v378 = vadd.f32 %v363, 1.0
        %v379 = vadd.f32 %v365, 1.0
        %v380 = vadd.f32 %v367, 1.0
        %v381 = vrcp.pop %v368
        %v382 = vmul.f32 1.0, %v381
        %v383 = vrcp.pop %v369
        %v384 = vmul.f32 1.0, %v383
        %v385 = vrcp.pop %v370
        %v386 = vmul.f32 1.0, %v385
        %v387 = vrcp.pop %v371
        %v388 = vmul.f32 1.0, %v387
        %v389 = vrcp.pop %v372
        %v390 = vmul.f32 1.0, %v389
        %v391 = vrcp.pop %v373
        %v392 = vmul.f32 1.0, %v391
        %v393 = vrcp.pop %v374
        %v394 = vmul.f32 1.0, %v393
        %v395 = vrcp.pop %v375
        %v396 = vmul.f32 1.0, %v395
        %v397 = vrcp.pop %v376
        %v398 = vmul.f32 1.0, %v397
        %v399 = vrcp.pop %v377
        %v400 = vmul.f32 1.0, %v399
        %v401 = vrcp.pop %v378
        %v402 = vmul.f32 1.0, %v401
        %v403 = vrcp.pop %v379
        %v404 = vmul.f32 1.0, %v403
        %v405 = vrcp.pop %v380
        %v406 = vmul.f32 1.0, %v405
        %v407 = vld [vmem:[%s4 + $0x2] sm:$0x1]
        %v408 = vlaneseq
        %v409 = vshrl.u32 %v408, 7
        %v410 = vsub.s32 0, %v409
        %v411 = vrot.slane %v407, %v410
        %v412 = vld [vmem:[%s4] sm:$0x1]
        %414 = vset.pattern.permute.xlu0 0
        %415 = vperm.xlu0 %414, %v382
        %v416 = vpop.permute.xlu0 %415
        %419 = vset.pattern.permute.xlu0 0
        %420 = vperm.xlu0 %419, %v384
        %v421 = vpop.permute.xlu0 %420
        %424 = vset.pattern.permute.xlu0 0
        %425 = vperm.xlu0 %424, %v386
        %v426 = vpop.permute.xlu0 %425
        %429 = vset.pattern.permute.xlu0 0
        %430 = vperm.xlu0 %429, %v388
        %v431 = vpop.permute.xlu0 %430
        %434 = vset.pattern.permute.xlu0 0
        %435 = vperm.xlu0 %434, %v390
        %v436 = vpop.permute.xlu0 %435
        %439 = vset.pattern.permute.xlu0 0
        %440 = vperm.xlu0 %439, %v392
        %v441 = vpop.permute.xlu0 %440
        %444 = vset.pattern.permute.xlu0 0
        %445 = vperm.xlu0 %444, %v394
        %v446 = vpop.permute.xlu0 %445
        %449 = vset.pattern.permute.xlu0 0
        %450 = vperm.xlu0 %449, %v396
        %v451 = vpop.permute.xlu0 %450
        %454 = vset.pattern.permute.xlu0 0
        %455 = vperm.xlu0 %454, %v398
        %v456 = vpop.permute.xlu0 %455
        %459 = vset.pattern.permute.xlu0 0
        %460 = vperm.xlu0 %459, %v400
        %v461 = vpop.permute.xlu0 %460
        %464 = vset.pattern.permute.xlu0 0
        %465 = vperm.xlu0 %464, %v402
        %v466 = vpop.permute.xlu0 %465
        %469 = vset.pattern.permute.xlu0 0
        %470 = vperm.xlu0 %469, %v404
        %v471 = vpop.permute.xlu0 %470
        %474 = vset.pattern.permute.xlu0 0
        %475 = vperm.xlu0 %474, %v406
        %v476 = vpop.permute.xlu0 %475
        %v478 = vlaneseq
        %v479 = vshrl.u32 %v478, 7
        %v480 = vsub.s32 0, %v479
        %v481 = vrot.slane %v412, %v480
        %v482 = vmul.f32 %v416, %v481
        %v483 = vmul.f32 %v421, %v481
        %v484 = vmul.f32 %v426, %v481
        %v485 = vmul.f32 %v431, %v481
        %v486 = vmul.f32 %v436, %v481
        %v487 = vmul.f32 %v441, %v481
        %v488 = vmul.f32 %v446, %v481
        %v489 = vmul.f32 %v451, %v481
        %v490 = vmul.f32 %v456, %v481
        %v491 = vmul.f32 %v461, %v481
        %v492 = vmul.f32 %v466, %v481
        %v493 = vmul.f32 %v471, %v481
        %v494 = vmul.f32 %v476, %v481
        %v495 = vadd.f32 %v411, %v482
        %v496 = vadd.f32 %v411, %v483
        %v497 = vadd.f32 %v411, %v484
        %v498 = vadd.f32 %v411, %v485
        %v499 = vadd.f32 %v411, %v486
        %v500 = vadd.f32 %v411, %v487
        %v501 = vadd.f32 %v411, %v488
        %v502 = vadd.f32 %v411, %v489
        %v503 = vadd.f32 %v411, %v490
        %v504 = vadd.f32 %v411, %v491
        %v505 = vadd.f32 %v411, %v492
        %v506 = vadd.f32 %v411, %v493
        %v507 = vadd.f32 %v411, %v494
        %v508 = vld [vmem:[%s4 + $0x1] sm:$0x1]
        %509 = vset.pattern.permute.xlu0 1
        %510 = vperm.xlu0 %509, %v382
        %v511 = vpop.permute.xlu0 %510
        %513 = vset.pattern.permute.xlu0 1
        %514 = vperm.xlu0 %513, %v384
        %v515 = vpop.permute.xlu0 %514
        %517 = vset.pattern.permute.xlu0 1
        %518 = vperm.xlu0 %517, %v386
        %v519 = vpop.permute.xlu0 %518
        %521 = vset.pattern.permute.xlu0 1
        %522 = vperm.xlu0 %521, %v388
        %v523 = vpop.permute.xlu0 %522
        %525 = vset.pattern.permute.xlu0 1
        %526 = vperm.xlu0 %525, %v390
        %v527 = vpop.permute.xlu0 %526
        %529 = vset.pattern.permute.xlu0 1
        %530 = vperm.xlu0 %529, %v392
        %v531 = vpop.permute.xlu0 %530
        %533 = vset.pattern.permute.xlu0 1
        %534 = vperm.xlu0 %533, %v394
        %v535 = vpop.permute.xlu0 %534
        %537 = vset.pattern.permute.xlu0 1
        %538 = vperm.xlu0 %537, %v396
        %v539 = vpop.permute.xlu0 %538
        %541 = vset.pattern.permute.xlu0 1
        %542 = vperm.xlu0 %541, %v398
        %v543 = vpop.permute.xlu0 %542
        %545 = vset.pattern.permute.xlu0 1
        %546 = vperm.xlu0 %545, %v400
        %v547 = vpop.permute.xlu0 %546
        %549 = vset.pattern.permute.xlu0 1
        %550 = vperm.xlu0 %549, %v402
        %v551 = vpop.permute.xlu0 %550
        %553 = vset.pattern.permute.xlu0 1
        %554 = vperm.xlu0 %553, %v404
        %v555 = vpop.permute.xlu0 %554
        %557 = vset.pattern.permute.xlu0 1
        %558 = vperm.xlu0 %557, %v406
        %v559 = vpop.permute.xlu0 %558
        %v561 = vlaneseq
        %v562 = vshrl.u32 %v561, 7
        %v563 = vsub.s32 0, %v562
        %v564 = vrot.slane %v508, %v563
        %v565 = vmul.f32 %v511, %v564
        %v566 = vmul.f32 %v515, %v564
        %v567 = vmul.f32 %v519, %v564
        %v568 = vmul.f32 %v523, %v564
        %v569 = vmul.f32 %v527, %v564
        %v570 = vmul.f32 %v531, %v564
        %v571 = vmul.f32 %v535, %v564
        %v572 = vmul.f32 %v539, %v564
        %v573 = vmul.f32 %v543, %v564
        %v574 = vmul.f32 %v547, %v564
        %v575 = vmul.f32 %v551, %v564
        %v576 = vmul.f32 %v555, %v564
        %v577 = vmul.f32 %v559, %v564
        %v578 = vadd.f32 %v495, %v565
        %v579 = vadd.f32 %v496, %v566
        %v580 = vadd.f32 %v497, %v567
        %v581 = vadd.f32 %v498, %v568
        %v582 = vadd.f32 %v499, %v569
        %v583 = vadd.f32 %v500, %v570
        %v584 = vadd.f32 %v501, %v571
        %v585 = vadd.f32 %v502, %v572
        %v586 = vadd.f32 %v503, %v573
        %v587 = vadd.f32 %v504, %v574
        %v588 = vadd.f32 %v505, %v575
        %v589 = vadd.f32 %v506, %v576
        %v590 = vadd.f32 %v507, %v577
        %v591 = vld [vmem:[%s272] sm:$0xff]
        %v592 = vld [vmem:[%s272 + $0x8] sm:$0xff]
        %v593 = vld [vmem:[%s272 + $0x10] sm:$0xff]
        %v594 = vld [vmem:[%s272 + $0x18] sm:$0xff]
        %v595 = vld [vmem:[%s272 + $0x20] sm:$0xff]
        %v596 = vld [vmem:[%s272 + $0x28] sm:$0xff]
        %v597 = vld [vmem:[%s272 + $0x30] sm:$0xff]
        %v598 = vld [vmem:[%s272 + $0x38] sm:$0xff]
        %v599 = vld [vmem:[%s272 + $0x40] sm:$0xff]
        %v600 = vld [vmem:[%s272 + $0x48] sm:$0xff]
        %v601 = vld [vmem:[%s272 + $0x50] sm:$0xff]
        %v602 = vld [vmem:[%s272 + $0x58] sm:$0xff]
        %v603 = vld [vmem:[%s272 + $0x60] sm:$0xff]
        %v604 = vlaneseq
        %v605 = vand.u32 %v604, 127
        %606 = vset.pattern.permute.xlu0 0
        %607 = vperm.xlu0 %606, %v591
        %v608 = vpop.permute.xlu0 %607
        %609 = vset.pattern.permute.xlu0 0
        %610 = vperm.xlu0 %609, %v592
        %v611 = vpop.permute.xlu0 %610
        %612 = vset.pattern.permute.xlu0 0
        %613 = vperm.xlu0 %612, %v593
        %v614 = vpop.permute.xlu0 %613
        %615 = vset.pattern.permute.xlu0 0
        %616 = vperm.xlu0 %615, %v594
        %v617 = vpop.permute.xlu0 %616
        %618 = vset.pattern.permute.xlu0 0
        %619 = vperm.xlu0 %618, %v595
        %v620 = vpop.permute.xlu0 %619
        %621 = vset.pattern.permute.xlu0 0
        %622 = vperm.xlu0 %621, %v596
        %v623 = vpop.permute.xlu0 %622
        %624 = vset.pattern.permute.xlu0 0
        %625 = vperm.xlu0 %624, %v597
        %v626 = vpop.permute.xlu0 %625
        %627 = vset.pattern.permute.xlu0 0
        %628 = vperm.xlu0 %627, %v598
        %v629 = vpop.permute.xlu0 %628
        %630 = vset.pattern.permute.xlu0 0
        %631 = vperm.xlu0 %630, %v599
        %v632 = vpop.permute.xlu0 %631
        %633 = vset.pattern.permute.xlu0 0
        %634 = vperm.xlu0 %633, %v600
        %v635 = vpop.permute.xlu0 %634
        %636 = vset.pattern.permute.xlu0 0
        %637 = vperm.xlu0 %636, %v601
        %v638 = vpop.permute.xlu0 %637
        %639 = vset.pattern.permute.xlu0 0
        %640 = vperm.xlu0 %639, %v602
        %v641 = vpop.permute.xlu0 %640
        %642 = vset.pattern.permute.xlu0 0
        %643 = vperm.xlu0 %642, %v603
        %v644 = vpop.permute.xlu0 %643
        %vm645 = vcmp.eq.s32.totalorder %v605, %v608
        %vm646 = vcmp.eq.s32.totalorder %v605, %v611
        %vm647 = vcmp.eq.s32.totalorder %v605, %v614
        %vm648 = vcmp.eq.s32.totalorder %v605, %v617
        %vm649 = vcmp.eq.s32.totalorder %v605, %v620
        %vm650 = vcmp.eq.s32.totalorder %v605, %v623
        %vm651 = vcmp.eq.s32.totalorder %v605, %v626
        %vm652 = vcmp.eq.s32.totalorder %v605, %v629
        %vm653 = vcmp.eq.s32.totalorder %v605, %v632
        %vm654 = vcmp.eq.s32.totalorder %v605, %v635
        %vm655 = vcmp.eq.s32.totalorder %v605, %v638
        %vm656 = vcmp.eq.s32.totalorder %v605, %v641
        %vm657 = vcmp.eq.s32.totalorder %v605, %v644
        %v658 = vsel %vm645, 1, 0
        %v659 = vsel %vm646, 1, 0
        %v660 = vsel %vm647, 1, 0
        %v661 = vsel %vm648, 1, 0
        %v662 = vsel %vm649, 1, 0
        %v663 = vsel %vm650, 1, 0
        %v664 = vsel %vm651, 1, 0
        %v665 = vsel %vm652, 1, 0
        %v666 = vsel %vm653, 1, 0
        %v667 = vsel %vm654, 1, 0
        %v668 = vsel %vm655, 1, 0
        %v669 = vsel %vm656, 1, 0
        %v670 = vsel %vm657, 1, 0
        %671 = vset.pattern.permute.xlu0 1
        %672 = vperm.xlu0 %671, %v591
        %v673 = vpop.permute.xlu0 %672
        %674 = vset.pattern.permute.xlu0 1
        %675 = vperm.xlu0 %674, %v592
        %v676 = vpop.permute.xlu0 %675
        %677 = vset.pattern.permute.xlu0 1
        %678 = vperm.xlu0 %677, %v593
        %v679 = vpop.permute.xlu0 %678
        %680 = vset.pattern.permute.xlu0 1
        %681 = vperm.xlu0 %680, %v594
        %v682 = vpop.permute.xlu0 %681
        %683 = vset.pattern.permute.xlu0 1
        %684 = vperm.xlu0 %683, %v595
        %v685 = vpop.permute.xlu0 %684
        %686 = vset.pattern.permute.xlu0 1
        %687 = vperm.xlu0 %686, %v596
        %v688 = vpop.permute.xlu0 %687
        %689 = vset.pattern.permute.xlu0 1
        %690 = vperm.xlu0 %689, %v597
        %v691 = vpop.permute.xlu0 %690
        %692 = vset.pattern.permute.xlu0 1
        %693 = vperm.xlu0 %692, %v598
        %v694 = vpop.permute.xlu0 %693
        %695 = vset.pattern.permute.xlu0 1
        %696 = vperm.xlu0 %695, %v599
        %v697 = vpop.permute.xlu0 %696
        %698 = vset.pattern.permute.xlu0 1
        %699 = vperm.xlu0 %698, %v600
        %v700 = vpop.permute.xlu0 %699
        %701 = vset.pattern.permute.xlu0 1
        %702 = vperm.xlu0 %701, %v601
        %v703 = vpop.permute.xlu0 %702
        %704 = vset.pattern.permute.xlu0 1
        %705 = vperm.xlu0 %704, %v602
        %v706 = vpop.permute.xlu0 %705
        %707 = vset.pattern.permute.xlu0 1
        %708 = vperm.xlu0 %707, %v603
        %v709 = vpop.permute.xlu0 %708
        %vm710 = vcmp.eq.s32.totalorder %v605, %v673
        %vm711 = vcmp.eq.s32.totalorder %v605, %v676
        %vm712 = vcmp.eq.s32.totalorder %v605, %v679
        %vm713 = vcmp.eq.s32.totalorder %v605, %v682
        %vm714 = vcmp.eq.s32.totalorder %v605, %v685
        %vm715 = vcmp.eq.s32.totalorder %v605, %v688
        %vm716 = vcmp.eq.s32.totalorder %v605, %v691
        %vm717 = vcmp.eq.s32.totalorder %v605, %v694
        %vm718 = vcmp.eq.s32.totalorder %v605, %v697
        %vm719 = vcmp.eq.s32.totalorder %v605, %v700
        %vm720 = vcmp.eq.s32.totalorder %v605, %v703
        %vm721 = vcmp.eq.s32.totalorder %v605, %v706
        %vm722 = vcmp.eq.s32.totalorder %v605, %v709
        %v723 = vsel %vm710, 1, 0
        %v724 = vsel %vm711, 1, 0
        %v725 = vsel %vm712, 1, 0
        %v726 = vsel %vm713, 1, 0
        %v727 = vsel %vm714, 1, 0
        %v728 = vsel %vm715, 1, 0
        %v729 = vsel %vm716, 1, 0
        %v730 = vsel %vm717, 1, 0
        %v731 = vsel %vm718, 1, 0
        %v732 = vsel %vm719, 1, 0
        %v733 = vsel %vm720, 1, 0
        %v734 = vsel %vm721, 1, 0
        %v735 = vsel %vm722, 1, 0
        %v736 = vadd.s32 %v658, %v723
        %v737 = vadd.s32 %v659, %v724
        %v738 = vadd.s32 %v660, %v725
        %v739 = vadd.s32 %v661, %v726
        %v740 = vadd.s32 %v662, %v727
        %v741 = vadd.s32 %v663, %v728
        %v742 = vadd.s32 %v664, %v729
        %v743 = vadd.s32 %v665, %v730
        %v744 = vadd.s32 %v666, %v731
        %v745 = vadd.s32 %v667, %v732
        %v746 = vadd.s32 %v668, %v733
        %v747 = vadd.s32 %v669, %v734
        %v748 = vadd.s32 %v670, %v735
        %v749 = vcvt.s32.f32 %v736
        %v750 = vcvt.s32.f32 %v737
        %v751 = vcvt.s32.f32 %v738
        %v752 = vcvt.s32.f32 %v739
        %v753 = vcvt.s32.f32 %v740
        %v754 = vcvt.s32.f32 %v741
        %v755 = vcvt.s32.f32 %v742
        %v756 = vcvt.s32.f32 %v743
        %v757 = vcvt.s32.f32 %v744
        %v758 = vcvt.s32.f32 %v745
        %v759 = vcvt.s32.f32 %v746
        %v760 = vcvt.s32.f32 %v747
        %v761 = vcvt.s32.f32 %v748
        %v762 = vpack.c.bf16 %v750, %v749
        %v763 = vpack.c.bf16 %v752, %v751
        %v764 = vpack.c.bf16 %v754, %v753
        %v765 = vpack.c.bf16 %v756, %v755
        %v766 = vpack.c.bf16 %v758, %v757
        %v767 = vpack.c.bf16 %v760, %v759
        %v768 = vpack.c.bf16 %v761, %v761
        %v769 = vld [vmem:[%s5] sm:$0xf]
        %v770 = vld [vmem:[%s5 + $0x4] sm:$0xf]
        %v771 = vld [vmem:[%s5 + $0x8] sm:$0xf]
        %v772 = vld [vmem:[%s5 + $0xc] sm:$0xf]
        %v773 = vld [vmem:[%s5 + $0x10] sm:$0xf]
        %v774 = vld [vmem:[%s5 + $0x14] sm:$0xf]
        %v775 = vld [vmem:[%s5 + $0x18] sm:$0xf]
        %v776 = vld [vmem:[%s5 + $0x1c] sm:$0xf]
        %v777 = vld [vmem:[%s5 + $0x20] sm:$0xf]
        %v778 = vld [vmem:[%s5 + $0x24] sm:$0xf]
        %v779 = vld [vmem:[%s5 + $0x28] sm:$0xf]
        %v780 = vld [vmem:[%s5 + $0x2c] sm:$0xf]
        %v781 = vld [vmem:[%s5 + $0x30] sm:$0xf]
        %v782 = vld [vmem:[%s5 + $0x34] sm:$0xf]
        %v783 = vld [vmem:[%s5 + $0x38] sm:$0xf]
        %v784 = vld [vmem:[%s5 + $0x3c] sm:$0xf]
        %v801 = vunpack.c.l.b16 %v769
        %v802 = vunpack.c.l.b16 %v770
        %v803 = vunpack.c.l.b16 %v771
        %v804 = vunpack.c.l.b16 %v772
        %v805 = vunpack.c.l.b16 %v773
        %v806 = vunpack.c.l.b16 %v774
        %v807 = vunpack.c.l.b16 %v775
        %v808 = vunpack.c.l.b16 %v776
        %v809 = vunpack.c.l.b16 %v777
        %v810 = vunpack.c.l.b16 %v778
        %v811 = vunpack.c.l.b16 %v779
        %v812 = vunpack.c.l.b16 %v780
        %v813 = vunpack.c.l.b16 %v781
        %v814 = vunpack.c.l.b16 %v782
        %v815 = vunpack.c.l.b16 %v783
        %v816 = vunpack.c.l.b16 %v784
        %v817 = vpack.c.b16 %v802, %v801
        %v818 = vpack.c.b16 %v804, %v803
        %v819 = vpack.c.b16 %v806, %v805
        %v820 = vpack.c.b16 %v808, %v807
        %v821 = vpack.c.b16 %v810, %v809
        %v822 = vpack.c.b16 %v812, %v811
        %v823 = vpack.c.b16 %v814, %v813
        %v824 = vpack.c.b16 %v816, %v815
        %833 = vmatprep.subr.bf16.mxu0 0
        %834 = vmatpush1.bf16.msra.mxu0 %v824
        %835 = vmatprep.subr.bf16.mxu0 0
        %836 = vmatpush1.bf16.msra.mxu0 %v823
        %837 = vmatprep.subr.bf16.mxu0 0
        %838 = vmatpush1.bf16.msra.mxu0 %v822
        %839 = vmatprep.subr.bf16.mxu0 0
        %840 = vmatpush1.bf16.msra.mxu0 %v821
        %841 = vmatprep.subr.bf16.mxu0 0
        %842 = vmatpush1.bf16.msra.mxu0 %v820
        %843 = vmatprep.subr.bf16.mxu0 0
        %844 = vmatpush1.bf16.msra.mxu0 %v819
        %845 = vmatprep.subr.bf16.mxu0 0
        %846 = vmatpush1.bf16.msra.mxu0 %v818
        %847 = vmatprep.subr.bf16.mxu0 0
        %848 = vmatpush1.bf16.msra.mxu0 %v817
        %849 = vmatprep.subr.bf16.mxu0 0
        %850 = vmatpush2.bf16.msra.mxu0 0
        %851 = vmatprep.subr.bf16.mxu0 0
        %852 = vmatpush2.bf16.msra.mxu0 0
        %853 = vmatprep.subr.bf16.mxu0 0
        %854 = vmatpush2.bf16.msra.mxu0 0
        %855 = vmatprep.subr.bf16.mxu0 0
        %856 = vmatpush2.bf16.msra.mxu0 0
        %857 = vmatprep.subr.bf16.mxu0 0
        %858 = vmatpush2.bf16.msra.mxu0 0
        %859 = vmatprep.subr.bf16.mxu0 0
        %860 = vmatpush2.bf16.msra.mxu0 0
        %861 = vmatprep.subr.bf16.mxu0 0
        %862 = vmatpush2.bf16.msra.mxu0 0
        %863 = vmatprep.subr.bf16.mxu0 0
        %864 = vmatpush2.bf16.msra.mxu0 0
        %865 = vmatprep.mubr.bf16.mxu0 0
        %866 = vmatmul.mubr.bf16.gmra.mxu0 %v762
        %v867 = vpop.f32.mrf.mxu0
        %v868 = vadd.f32 0.0, %v867
        %v869 = vpop.f32.mrf.mxu0
        %v870 = vpop.f32.mrf.mxu0
        %v871 = vadd.f32 0.0, %v870
        %v872 = vpop.f32.mrf.mxu0
        %873 = vmatprep.mubr.bf16.mxu0 0
        %874 = vmatmul.mubr.bf16.gmra.mxu0 %v763
        %v875 = vpop.f32.mrf.mxu0
        %v876 = vadd.f32 0.0, %v875
        %v877 = vpop.f32.mrf.mxu0
        %v878 = vpop.f32.mrf.mxu0
        %v879 = vadd.f32 0.0, %v878
        %v880 = vpop.f32.mrf.mxu0
        %881 = vmatprep.mubr.bf16.mxu0 0
        %882 = vmatmul.mubr.bf16.gmra.mxu0 %v764
        %v883 = vpop.f32.mrf.mxu0
        %v884 = vadd.f32 0.0, %v883
        %v885 = vpop.f32.mrf.mxu0
        %v886 = vpop.f32.mrf.mxu0
        %v887 = vadd.f32 0.0, %v886
        %v888 = vpop.f32.mrf.mxu0
        %889 = vmatprep.mubr.bf16.mxu0 0
        %890 = vmatmul.mubr.bf16.gmra.mxu0 %v765
        %v891 = vpop.f32.mrf.mxu0
        %v892 = vadd.f32 0.0, %v891
        %v893 = vpop.f32.mrf.mxu0
        %v894 = vpop.f32.mrf.mxu0
        %v895 = vadd.f32 0.0, %v894
        %v896 = vpop.f32.mrf.mxu0
        %897 = vmatprep.mubr.bf16.mxu0 0
        %898 = vmatmul.mubr.bf16.gmra.mxu0 %v766
        %v899 = vpop.f32.mrf.mxu0
        %v900 = vadd.f32 0.0, %v899
        %v901 = vpop.f32.mrf.mxu0
        %v902 = vpop.f32.mrf.mxu0
        %v903 = vadd.f32 0.0, %v902
        %v904 = vpop.f32.mrf.mxu0
        %905 = vmatprep.mubr.bf16.mxu0 0
        %906 = vmatmul.mubr.bf16.gmra.mxu0 %v767
        %v907 = vpop.f32.mrf.mxu0
        %v908 = vadd.f32 0.0, %v907
        %v909 = vpop.f32.mrf.mxu0
        %v910 = vpop.f32.mrf.mxu0
        %v911 = vadd.f32 0.0, %v910
        %v912 = vpop.f32.mrf.mxu0
        %913 = vmatprep.mubr.bf16.mxu0 0
        %914 = vmatmul.mubr.bf16.gmra.mxu0 %v768
        %v915 = vpop.f32.mrf.mxu0
        %v916 = vadd.f32 0.0, %v915
        %v917 = vpop.f32.mrf.mxu0
        %v918 = vpop.f32.mrf.mxu0
        %v919 = vpop.f32.mrf.mxu0
        %920 = vdwg.mxu0
        %v921 = vadd.f32 %v578, %v868
        %v922 = vadd.f32 %v579, %v871
        %v923 = vadd.f32 %v580, %v876
        %v924 = vadd.f32 %v581, %v879
        %v925 = vadd.f32 %v582, %v884
        %v926 = vadd.f32 %v583, %v887
        %v927 = vadd.f32 %v584, %v892
        %v928 = vadd.f32 %v585, %v895
        %v929 = vadd.f32 %v586, %v900
        %v930 = vadd.f32 %v587, %v903
        %v931 = vadd.f32 %v588, %v908
        %v932 = vadd.f32 %v589, %v911
        %v933 = vadd.f32 %v590, %v916
        %v934 = vpack.c.bf16 %v922, %v921
        %v935 = vpack.c.bf16 %v924, %v923
        %v936 = vpack.c.bf16 %v926, %v925
        %v937 = vpack.c.bf16 %v928, %v927
        %v938 = vpack.c.bf16 %v930, %v929
        %v939 = vpack.c.bf16 %v932, %v931
        %v940 = vpack.c.bf16 %v933, %v933
        %v948 = vunpack.c.l.b16 %v934
        %v949 = vunpack.c.h.b16 %v934
        %v950 = vunpack.c.l.b16 %v935
        %v951 = vunpack.c.h.b16 %v935
        %v952 = vunpack.c.l.b16 %v936
        %v953 = vunpack.c.h.b16 %v936
        %v954 = vunpack.c.l.b16 %v937
        %v955 = vunpack.c.h.b16 %v937
        %v956 = vunpack.c.l.b16 %v938
        %v957 = vunpack.c.h.b16 %v938
        %v958 = vunpack.c.l.b16 %v939
        %v959 = vunpack.c.h.b16 %v939
        %v960 = vunpack.c.l.b16 %v940
        %v961 = vpack.c.b16 %v948, %v948
        %v962 = vpack.c.b16 %v949, %v949
        %v963 = vpack.c.b16 %v950, %v950
        %v964 = vpack.c.b16 %v951, %v951
        %v965 = vpack.c.b16 %v952, %v952
        %v966 = vpack.c.b16 %v953, %v953
        %v967 = vpack.c.b16 %v954, %v954
        %v968 = vpack.c.b16 %v955, %v955
        %v969 = vpack.c.b16 %v956, %v956
        %v970 = vpack.c.b16 %v957, %v957
        %v971 = vpack.c.b16 %v958, %v958
        %v972 = vpack.c.b16 %v959, %v959
        %v973 = vpack.c.b16 %v960, %v960
        %987 = vst [vmem:[%s261] sm:$0xf] %v961
        %988 = vst [vmem:[%s261 + $0x4] sm:$0xf] %v962
        %989 = vst [vmem:[%s261 + $0x8] sm:$0xf] %v963
        %990 = vst [vmem:[%s261 + $0xc] sm:$0xf] %v964
        %991 = vst [vmem:[%s261 + $0x10] sm:$0xf] %v965
        %992 = vst [vmem:[%s261 + $0x14] sm:$0xf] %v966
        %993 = vst [vmem:[%s261 + $0x18] sm:$0xf] %v967
        %994 = vst [vmem:[%s261 + $0x1c] sm:$0xf] %v968
        %995 = vst [vmem:[%s261 + $0x20] sm:$0xf] %v969
        %996 = vst [vmem:[%s261 + $0x24] sm:$0xf] %v970
        %997 = vst [vmem:[%s261 + $0x28] sm:$0xf] %v971
        %998 = vst [vmem:[%s261 + $0x2c] sm:$0xf] %v972
        %999 = vst [vmem:[%s261 + $0x30] sm:$0xf] %v973
        %s1000 = sand.u32 %s164, 1
        %s1001 = scalar_lea.sflag [#allocation3], %s1000
        %s1002 = sand.u32 %s164, 1
        %s1003 = smul.addr %s1002, 52
        %s1004 = scalar_lea.vmem [#allocation2], %s1003
        // Predicated region
        $region45: #{tpu_custom_call.1} parent=43 // pred_check
          %p1005 = pneg %p174
        $region46: #{tpu_custom_call.1} parent=43 // pred_check_branch
          %1007 = sbr.rel (%p1005) target = $region48
        $region47: #{tpu_custom_call.1} parent=43 // pred_region
          %s1008 = smul.u32 13, %s20
          %s1010 = ssub.s32 832, 832
          %1011 = vsyncadd %s1001, %s1010
          %s1012 = smul.addr %s1008, 64
          %s1013 = scalar_lea.hbm %s6, %s1012
          %s1014 = sshll.u32 %s1004, 4
          %s1015 = int_to_ptr.vmem [resolvable:$true] %s1014
          %1020 = dma.vmem_to_hbm [thread:$0]  %s1015, 832, %s1013, %s1001, 64, 64, 4
        $region48: #{tpu_custom_call.1} parent=43 // pred_fallthru
          _
      $region44: #{tpu_custom_call.1} parent=5 // pred_fallthru
        _
      %p1021 = scmp.le.s32.totalorder 2, %s15
      // Predicated region
      $region49: #{tpu_custom_call.1} parent=5 // pred_check
        %p1022 = pneg %p1021
      $region50: #{tpu_custom_call.1} parent=5 // pred_check_branch
        %1024 = sbr.rel (%p1022) target = $region52
      $region51: #{tpu_custom_call.1} parent=5 // pred_region
        %s1025 = ssub.s32 %s15, 2
        // Predicated region
        $region53: #{tpu_custom_call.1} parent=51 // pred_check
          %p1026 = pneg %p180
        $region54: #{tpu_custom_call.1} parent=51 // pred_check_branch
          %1028 = sbr.rel (%p1026) target = $region56
        $region55: #{tpu_custom_call.1} parent=51 // pred_region
          %s1029 = sand.u32 %s165, 1
          %s1030 = scalar_lea.sflag [#allocation3], %s1029
          %s1031 = sand.u32 %s165, 1
          %s1032 = smul.addr %s1031, 52
          %s1033 = scalar_lea.vmem [#allocation2], %s1032
          %1034 = dma.done %s1030, 832
        $region56: #{tpu_custom_call.1} parent=51 // pred_fallthru
          _
      $region52: #{tpu_custom_call.1} parent=5 // pred_fallthru
        _
    $region6: #{tpu_custom_call.1} parent=1 // loop_footer
      %s19 = sadd.s32 1, %s15
    $region7: #{tpu_custom_call.1} parent=1 // loop_footer_branch
      %14 = sbr.rel target = $region3
    $region8: #{tpu_custom_call.1} parent=1 // loop_exit
      _
    %1035 = vsyncpa [#allocation3], 1
    %s1036 = scalar_lea.sflag [#allocation3], 1
    %1037 = vsyncpa %s1036, 1

</llo_original>
